<compile_context>
chip_gen: v7x
topology: tpu7x:2x2x1
jax: 0.10.0
libtpu: 0.0.40
codegen_flags: <defaults>
</compile_context>

<pallas_src>
import functools

import jax
import jax.numpy as jnp
from jax import lax
from jax.experimental import pallas as pl
from jax.experimental.pallas import tpu as pltpu


def _attention_kernel(x_ref, w_ref, b_ref, o_ref, *, bb, seq, seq_real, d_in, dp):
    # x block: (bb, seq, d_in) f32.  seq % 8 == 0, so merging (bb, seq) into the
    # matmul M dimension is a pure layout no-op.
    x2 = x_ref[...].reshape(bb * seq, d_in)

    # Fused QKV projection on the MXU: bf16 operands, f32 accumulation.
    # The 1/sqrt(d_model) scale is already folded into the Q columns/bias.
    qkv = jnp.dot(x2.astype(jnp.bfloat16), w_ref[...],
                  preferred_element_type=jnp.float32) + b_ref[...]
    qkv = qkv.reshape(bb, seq, 3 * dp)

    q = qkv[:, :, :dp]              # pre-scaled by 1/sqrt(D)
    k = qkv[:, :, dp:2 * dp]
    v = qkv[:, :, 2 * dp:]

    # scores = Q @ K^T as a feature-dim contraction batched over bb
    # (no explicit transpose); bf16 MXU inputs, f32 accumulation.
    scores = lax.dot_general(
        q.astype(jnp.bfloat16), k.astype(jnp.bfloat16),
        dimension_numbers=(((2,), (2,)), ((0,), (0,))),
        preferred_element_type=jnp.float32)

    if seq != seq_real:
        # Mask padded key positions out of the softmax (static branch).
        kidx = lax.broadcasted_iota(jnp.int32, (bb, seq, seq), 2)
        scores = jnp.where(kidx < seq_real, scores, -jnp.inf)

    # Numerically stable softmax; all reduction math in f32.
    m = jnp.max(scores, axis=-1, keepdims=True)
    e = jnp.exp(scores - m)
    denom = jnp.sum(e, axis=-1, keepdims=True)

    # Deferred normalization: out = (e @ V) * (1/denom).  EUP approx
    # reciprocal stays off the VPU slot; the normalizing multiply is now
    # over (S, dp) instead of (S, S).
    out = lax.dot_general(
        e.astype(jnp.bfloat16), v.astype(jnp.bfloat16),
        dimension_numbers=(((2,), (1,)), ((0,), (0,))),
        preferred_element_type=jnp.float32)
    out = out * pl.reciprocal(denom, approx=True)

    o_ref[...] = out.astype(o_ref.dtype)


def _physical_vmem_bytes():
    """Best-effort physical VMEM size; conservative 64 MiB (v7x) fallback."""
    try:
        info = pltpu.get_tpu_info()
        for attr in ("vmem_capacity_bytes", "vmem_bytes", "vmem_size_bytes"):
            v = getattr(info, attr, None)
            if v:
                return int(v)
    except Exception:
        pass
    return 64 * 1024 * 1024


def _step_vmem_bytes(bb, s, d, dp):
    """Rough per-grid-step VMEM byte model used to gate bb."""
    w = 2 * d * 3 * dp * 2              # bf16 fused weight (count double-buffer)
    bias = 2 * 3 * dp * 4
    x_t = 2 * bb * s * d * 4            # double-buffered x tile (f32)
    o_t = 2 * bb * s * dp * 4           # double-buffered out tile (f32)
    qkv = bb * s * 3 * dp * 4           # f32 projection result
    qkv_bf = bb * s * 3 * dp * 2        # bf16 casts of q/k/v
    sc = 2 * bb * s * s * 4             # scores + e (f32)
    sc_bf = bb * s * s * 2              # bf16 e for the second matmul
    out = bb * s * dp * 4               # f32 output accumulator
    return w + bias + x_t + o_t + qkv + qkv_bf + sc + sc_bf + out


def simple_attention(x, wq, bq, wk, bk, wv, bv):
    """x: (B, S, D); wq/wk/wv: (D, D) PyTorch Linear weights (out, in); b*: (D,)."""
    B, S, D = x.shape
    inv_scale = 1.0 / (float(D) ** 0.5)

    # ---- wrapper-side layout prep ------------------------------------------
    # Pad only the *output* feature columns to a lane-dense multiple of 128.
    # The contraction dim of the fused projection stays D, so the activation
    # itself needs no feature padding (no extra HBM round-trip of x).
    dp = max(128, ((D + 127) // 128) * 128)
    pad = dp - D

    def prep_w(w, scale=1.0):           # torch (out, in) -> W^T (in, out), pad cols
        return jnp.pad(w.T * scale, ((0, 0), (0, pad)))

    def prep_b(b, scale=1.0):
        return jnp.pad(b * scale, (0, pad))

    w_qkv = jnp.concatenate(
        [prep_w(wq, inv_scale), prep_w(wk), prep_w(wv)],
        axis=1).astype(jnp.bfloat16)                         # (D, 3*dp) bf16
    b_qkv = jnp.concatenate(
        [prep_b(bq, inv_scale), prep_b(bk), prep_b(bv)]
    ).reshape(1, 3 * dp).astype(jnp.float32)                 # f32 (added post-acc)

    # Pad S to a multiple of 8 so the (bb,S,D)->(bb*S,D) merge is a layout
    # no-op; padded key rows are masked out of the softmax in-kernel.
    s_pad = ((S + 7) // 8) * 8

    # ---- bb / grid selection gated by an explicit VMEM byte model ----------
    phys_vmem = _physical_vmem_bytes()
    vmem_limit = int(min(phys_vmem * 0.85, 100 * 1024 * 1024))

    target_rows = 512
    max_bb = max(1, B // 2)             # force grid >= 2 whenever B >= 2
    bb = 1
    for cand in range(1, max_bb + 1):
        if cand * s_pad > max(target_rows, s_pad):
            break
        if _step_vmem_bytes(cand, s_pad, D, dp) > vmem_limit:
            break
        bb = cand
    grid_n = pl.cdiv(B, bb)             # ragged last group handled by padding B
    b_pad = grid_n * bb

    x_p = x
    if b_pad != B or s_pad != S:
        x_p = jnp.pad(x, ((0, b_pad - B), (0, s_pad - S), (0, 0)))

    kernel = functools.partial(_attention_kernel, bb=bb, seq=s_pad,
                               seq_real=S, d_in=D, dp=dp)

    x_spec_kwargs = {}
    if grid_n >= 4:
        # Deepen prefetch on the activation stream only when the grid is long;
        # the weight/bias specs keep a constant index_map and stay resident.
        x_spec_kwargs["pipeline_mode"] = pl.Buffered(3)

    out_p = pl.pallas_call(
        kernel,
        out_shape=jax.ShapeDtypeStruct((b_pad, s_pad, dp), x.dtype),
        grid_spec=pltpu.PrefetchScalarGridSpec(
            num_scalar_prefetch=0,
            grid=(grid_n,),
            in_specs=[
                pl.BlockSpec((bb, s_pad, D), lambda i: (i, 0, 0),
                             **x_spec_kwargs),                 # x (unpadded lanes)
                pl.BlockSpec((D, 3 * dp), lambda i: (0, 0)),   # fused Wqkv^T (bf16)
                pl.BlockSpec((1, 3 * dp), lambda i: (0, 0)),   # fused bias (f32)
            ],
            out_specs=pl.BlockSpec((bb, s_pad, dp), lambda i: (i, 0, 0)),
        ),
        compiler_params=pltpu.CompilerParams(
            dimension_semantics=("parallel",),
            vmem_limit_bytes=vmem_limit),
    )(x_p, w_qkv, b_qkv)

    # Drop batch / sequence / lane padding.
    return out_p[:B, :S, :D]


def _reference(x, wq, bq, wk, bk, wv, bv):
    D = x.shape[-1]
    q = jnp.einsum("bsd,ed->bse", x, wq) + bq
    k = jnp.einsum("bsd,ed->bse", x, wk) + bk
    v = jnp.einsum("bsd,ed->bse", x, wv) + bv
    scores = jnp.einsum("bqd,bkd->bqk", q, k) / (D ** 0.5)
    w = jax.nn.softmax(scores, axis=-1)
    return jnp.einsum("bqk,bkd->bqd", w, v)


if __name__ == "__main__":
    B, S, D = 2, 8, 32
    key = jax.random.PRNGKey(0)
    kx, kq, kbq, kk, kbk, kv, kbv = jax.random.split(key, 7)

    x = jax.random.normal(kx, (B, S, D), dtype=jnp.float32)

    # PyTorch Linear-style init: weight (out, in) = (D, D), bias (D,)
    bound = 1.0 / (D ** 0.5)
    wq = jax.random.uniform(kq, (D, D), jnp.float32, -bound, bound)
    bq = jax.random.uniform(kbq, (D,), jnp.float32, -bound, bound)
    wk = jax.random.uniform(kk, (D, D), jnp.float32, -bound, bound)
    bk = jax.random.uniform(kbk, (D,), jnp.float32, -bound, bound)
    wv = jax.random.uniform(kv, (D, D), jnp.float32, -bound, bound)
    bv = jax.random.uniform(kbv, (D,), jnp.float32, -bound, bound)

    out = simple_attention(x, wq, bq, wk, bk, wv, bv)
    out = jax.block_until_ready(out)

    ref = _reference(x, wq, bq, wk, bk, wv, bv)
    assert out.shape == (B, S, D)
    # bf16 MXU operands + approx reciprocal -> compare at bf16-level tolerance
    # (f32 reference).  Use exact f32 matmuls if a tighter path is required.
    assert jnp.allclose(out, ref, atol=2e-2, rtol=2e-2), "mismatch vs reference"

    print("KERNEL_OK")
</pallas_src>

<mosaic_0001>
module attributes {stable_mosaic.version = 11 : i64} {
  func.func @_attention_kernel(%arg0: i32, %arg1: memref<1x8x32xf32, #tpu.memory_space<vmem>>, %arg2: memref<32x384xbf16, #tpu.memory_space<vmem>>, %arg3: memref<1x384xf32, #tpu.memory_space<vmem>>, %arg4: memref<1x8x128xf32, #tpu.memory_space<vmem>>) attributes {dimension_semantics = [#tpu.dimension_semantics<parallel>], iteration_bounds = array<i64: 2>, scalar_prefetch = 0 : i64, scratch_operands = 0 : i64, tpu.core_type = #tpu.core_type<tc>, window_params = [{transform_indices = @transform_0, window_bounds = array<i64: 1, 8, 32>}, {pipeline_mode = #tpu.pipeline_mode<synchronous>, transform_indices = @transform_1, window_bounds = array<i64: 32, 384>}, {pipeline_mode = #tpu.pipeline_mode<synchronous>, transform_indices = @transform_2, window_bounds = array<i64: 1, 384>}, {transform_indices = @transform_3, window_bounds = array<i64: 1, 8, 128>}]} {
    %c0 = arith.constant 0 : index
    %c0_0 = arith.constant 0 : index
    %c0_1 = arith.constant 0 : index
    %0 = vector.load %arg1[%c0, %c0_0, %c0_1] : memref<1x8x32xf32, #tpu.memory_space<vmem>>, vector<1x8x32xf32>
    %1 = vector.shape_cast %0 : vector<1x8x32xf32> to vector<8x32xf32>
    %2 = arith.truncf %1 : vector<8x32xf32> to vector<8x32xbf16>
    %c0_2 = arith.constant 0 : index
    %c0_3 = arith.constant 0 : index
    %3 = vector.load %arg2[%c0_2, %c0_3] : memref<32x384xbf16, #tpu.memory_space<vmem>>, vector<32x384xbf16>
    %cst = arith.constant dense<0.000000e+00> : vector<8x384xf32>
    %4 = tpu.matmul %2, %3, %cst {dimension_numbers = #tpu.dot_dimension_numbers<[1], [0], [0], [1], [0, 0, 1, 1], [], []>} : vector<8x32xbf16>, vector<32x384xbf16>, vector<8x384xf32> -> vector<8x384xf32>
    %c0_4 = arith.constant 0 : index
    %c0_5 = arith.constant 0 : index
    %5 = vector.load %arg3[%c0_4, %c0_5] : memref<1x384xf32, #tpu.memory_space<vmem>>, vector<1x384xf32>
    %6 = vector.broadcast %5 : vector<1x384xf32> to vector<8x384xf32>
    %7 = arith.addf %4, %6 : vector<8x384xf32>
    %8 = vector.shape_cast %7 : vector<8x384xf32> to vector<1x8x384xf32>
    %9 = vector.extract_strided_slice %8 {offsets = [0, 0, 0], sizes = [1, 8, 128], strides = [1, 1, 1]} : vector<1x8x384xf32> to vector<1x8x128xf32>
    %10 = vector.extract_strided_slice %8 {offsets = [0, 0, 128], sizes = [1, 8, 128], strides = [1, 1, 1]} : vector<1x8x384xf32> to vector<1x8x128xf32>
    %11 = vector.extract_strided_slice %8 {offsets = [0, 0, 256], sizes = [1, 8, 128], strides = [1, 1, 1]} : vector<1x8x384xf32> to vector<1x8x128xf32>
    %12 = arith.truncf %9 : vector<1x8x128xf32> to vector<1x8x128xbf16>
    %13 = arith.truncf %10 : vector<1x8x128xf32> to vector<1x8x128xbf16>
    %cst_6 = arith.constant dense<0.000000e+00> : vector<1x8x8xf32>
    %14 = tpu.matmul %12, %13, %cst_6 {dimension_numbers = #tpu.dot_dimension_numbers<[2], [2], [1], [1], [0, 0, 0, 1, 1, 1], [0], [0]>} : vector<1x8x128xbf16>, vector<1x8x128xbf16>, vector<1x8x8xf32> -> vector<1x8x8xf32>
    %cst_7 = arith.constant dense<0xFF800000> : vector<1x8xf32>
    %15 = vector.multi_reduction <maximumf>, %14, %cst_7 [2] : vector<1x8x8xf32> to vector<1x8xf32>
    %16 = vector.shape_cast %15 : vector<1x8xf32> to vector<1x8x1xf32>
    %17 = vector.broadcast %16 : vector<1x8x1xf32> to vector<1x8x8xf32>
    %18 = arith.subf %14, %17 : vector<1x8x8xf32>
    %19 = math.exp %18 : vector<1x8x8xf32>
    %cst_8 = arith.constant dense<0.000000e+00> : vector<1x8xf32>
    %20 = vector.multi_reduction <add>, %19, %cst_8 [2] : vector<1x8x8xf32> to vector<1x8xf32>
    %21 = vector.shape_cast %20 : vector<1x8xf32> to vector<1x8x1xf32>
    %22 = arith.truncf %19 : vector<1x8x8xf32> to vector<1x8x8xbf16>
    %23 = arith.truncf %11 : vector<1x8x128xf32> to vector<1x8x128xbf16>
    %cst_9 = arith.constant dense<0.000000e+00> : vector<1x8x128xf32>
    %24 = tpu.matmul %22, %23, %cst_9 {dimension_numbers = #tpu.dot_dimension_numbers<[2], [1], [1], [2], [0, 0, 0, 1, 1, 2], [0], [0]>} : vector<1x8x8xbf16>, vector<1x8x128xbf16>, vector<1x8x128xf32> -> vector<1x8x128xf32>
    %25 = tpu.reciprocal %21 {approx = true} : vector<1x8x1xf32> -> vector<1x8x1xf32>
    %26 = vector.broadcast %25 : vector<1x8x1xf32> to vector<1x8x128xf32>
    %27 = arith.mulf %24, %26 : vector<1x8x128xf32>
    %c0_10 = arith.constant 0 : index
    %c0_11 = arith.constant 0 : index
    %c0_12 = arith.constant 0 : index
    %28 = vector.load %arg4[%c0_10, %c0_11, %c0_12] : memref<1x8x128xf32, #tpu.memory_space<vmem>>, vector<1x8x128xf32>
    tpu.vector_store %arg4[%c0_10, %c0_11, %c0_12], %27 {strides = array<i32>} : memref<1x8x128xf32, #tpu.memory_space<vmem>>, vector<1x8x128xf32>,
    return
  }
  func.func @transform_0(%arg0: i32) -> (i32, i32, i32) {
    %c0_i32 = arith.constant 0 : i32
    %c0_i32_0 = arith.constant 0 : i32
    %c0_i32_1 = arith.constant 0 : i32
    return %arg0, %c0_i32, %c0_i32_0 : i32, i32, i32
  }
  func.func @transform_1(%arg0: i32) -> (i32, i32) {
    %c0_i32 = arith.constant 0 : i32
    %c0_i32_0 = arith.constant 0 : i32
    %c0_i32_1 = arith.constant 0 : i32
    return %c0_i32, %c0_i32_0 : i32, i32
  }
  func.func @transform_2(%arg0: i32) -> (i32, i32) {
    %c0_i32 = arith.constant 0 : i32
    %c0_i32_0 = arith.constant 0 : i32
    %c0_i32_1 = arith.constant 0 : i32
    return %c0_i32, %c0_i32_0 : i32, i32
  }
  func.func @transform_3(%arg0: i32) -> (i32, i32, i32) {
    %c0_i32 = arith.constant 0 : i32
    %c0_i32_0 = arith.constant 0 : i32
    %c0_i32_1 = arith.constant 0 : i32
    return %arg0, %c0_i32, %c0_i32_0 : i32, i32, i32
  }
}

</mosaic_0001>

<llo_original>
// kernel: tpu_custom_call.1
$region0: #{tpu_custom_call.1}
  #allocation0 [shape = 'u32[]', space=smem, size = 0x4, offset = 0x4, fixed_abs, tag = 'smem constant byte address 0x4 - core index']
  #allocation1 [shape = 'u32[144,128]{1,0:T(1,128)}', space=vmem, size = 0x12000, scoped, tag = 'internal scratch']
  %s0 = inlined_call_operand.hbm [shape: f32[2,8,32], index: 0, kind: input, shape index: {}]
  %s1 = inlined_call_operand.hbm [shape: bf16[32,384], index: 1, kind: input, shape index: {}]
  %s2 = inlined_call_operand.vmem [shape: f32[1,384], index: 2, kind: input, shape index: {}]
  %s3 = inlined_call_operand.hbm [shape: f32[2,8,128], index: 3, kind: output, shape index: {}]
  %s4 = sld [smem:[#allocation0]]
  $region53: #{tpu_custom_call.1} parent=0
    _
  %s6 = ssub.s32 1, %s4
  %s7 = scalar_select 0, %s6, %s4
  $region1: #{tpu_custom_call.1} parent=0
    #allocation2 [shape = 'u8[8192]{0}', space=vmem, size = 0x2000, scoped, tag = 'input window, operand 0']
    #allocation3 [shape = 's32[2]{0}', space=sflag, size = 0x8, scoped, tag = 'scoped memory for tpu_custom_call.1']
    #allocation4 [shape = 's32[2]{0}', space=sflag, size = 0x8, scoped, tag = 'scoped memory for tpu_custom_call.1']
    #allocation5 [shape = 'u8[24576]{0}', space=vmem, size = 0x6000, scoped, tag = 'input window, operand 1, single buffered']
    #allocation6 [shape = 's32[1]{0}', space=sflag, size = 0x4, scoped, tag = 'scoped memory for tpu_custom_call.1']
    #allocation7 [shape = 'u8[8192]{0}', space=vmem, size = 0x2000, scoped, tag = 'output window, operand 0']
    %8 = vsyncpa [#allocation3], 0
    %s9 = scalar_lea.sflag [#allocation3], 1
    %10 = vsyncpa %s9, 0
    %11 = vsyncpa [#allocation6], 0
    %12 = vsyncpa [#allocation4], 0
    %s13 = scalar_lea.sflag [#allocation4], 1
    %14 = vsyncpa %s13, 0
    loop: start=0, step=1, limit=4
    $region2: #{tpu_custom_call.1} parent=1 // loop_pre_header
      _
    $region3: #{tpu_custom_call.1} parent=1 // loop_header
      %s16 = sphi 0, %s20
      %p17 = scmp.ge.s32.totalorder %s16, 4
      %s26 = sphi 0, %s28
      %s29 = sphi 0, %s26
      %s30 = sphi 0, %s29
      %s46 = sphi 0, %s30
      %s50 = sphi 0, %s50
      %s52 = sphi 0, %s50
      %s53 = sphi 0, %s52
      %s67 = sphi 0, %s53
      %s71 = sphi 0, %s71
      %s73 = sphi 0, %s71
      %s74 = sphi 0, %s73
      %s88 = sphi 0, %s74
      %s94 = sphi 0, %s96
      %s97 = sphi 0, %s94
      %s98 = sphi 0, %s97
      %s114 = sphi 0, %s98
    $region4: #{tpu_custom_call.1} parent=1 // loop_header_branch
      %19 = sbr.rel (%p17) target = $region8
    $region5: #{tpu_custom_call.1} parent=1 // loop_body
      %s21 = ssub.s32 %s16, 1
      %s22 = ssub.s32 %s16, 2
      %s23 = sadd.s32 %s16, 1
      %s24 = ssub.s32 %s16, %s23
      %p25 = scmp.eq.s32.totalorder %s24, 0
      %s27 = sadd.s32 %s26, 1
      %s28 = scalar_select %p25, %s26, %s27
      %p31 = pneg %p25
      %p32 = scmp.eq.s32.totalorder %s16, 1
      %p33 = por %p31, %p32
      %p34 = scmp.ne.s32.totalorder %s26, %s29
      %p35 = scmp.eq.s32.totalorder %s16, 0
      %p36 = por %p34, %p35
      %p37 = scmp.ne.s32.totalorder %s26, %s29
      %p38 = scmp.eq.s32.totalorder %s21, 1
      %p39 = por %p37, %p38
      %p40 = scmp.ne.s32.totalorder %s29, %s30
      %p41 = scmp.eq.s32.totalorder %s21, 0
      %p42 = por %p40, %p41
      %p43 = scmp.ne.s32.totalorder %s29, %s30
      %p44 = scmp.eq.s32.totalorder %s22, 1
      %p45 = por %p43, %p44
      %p47 = scmp.ne.s32.totalorder %s30, %s46
      %p48 = scmp.eq.s32.totalorder %s22, 0
      %p49 = por %p47, %p48
      %s51 = sadd.s32 %s50, 1
      %p54 = scmp.eq.s32.totalorder %s16, 1
      %p55 = scmp.ne.s32.totalorder %s50, %s52
      %p56 = scmp.eq.s32.totalorder %s16, 0
      %p57 = por %p55, %p56
      %p58 = scmp.ne.s32.totalorder %s50, %s52
      %p59 = scmp.eq.s32.totalorder %s21, 1
      %p60 = por %p58, %p59
      %p61 = scmp.ne.s32.totalorder %s52, %s53
      %p62 = scmp.eq.s32.totalorder %s21, 0
      %p63 = por %p61, %p62
      %p64 = scmp.ne.s32.totalorder %s52, %s53
      %p65 = scmp.eq.s32.totalorder %s22, 1
      %p66 = por %p64, %p65
      %p68 = scmp.ne.s32.totalorder %s53, %s67
      %p69 = scmp.eq.s32.totalorder %s22, 0
      %p70 = por %p68, %p69
      %s72 = sadd.s32 %s71, 1
      %p75 = scmp.eq.s32.totalorder %s16, 1
      %p76 = scmp.ne.s32.totalorder %s71, %s73
      %p77 = scmp.eq.s32.totalorder %s16, 0
      %p78 = por %p76, %p77
      %p79 = scmp.ne.s32.totalorder %s71, %s73
      %p80 = scmp.eq.s32.totalorder %s21, 1
      %p81 = por %p79, %p80
      %p82 = scmp.ne.s32.totalorder %s73, %s74
      %p83 = scmp.eq.s32.totalorder %s21, 0
      %p84 = por %p82, %p83
      %p85 = scmp.ne.s32.totalorder %s73, %s74
      %p86 = scmp.eq.s32.totalorder %s22, 1
      %p87 = por %p85, %p86
      %p89 = scmp.ne.s32.totalorder %s74, %s88
      %p90 = scmp.eq.s32.totalorder %s22, 0
      %p91 = por %p89, %p90
      %s92 = ssub.s32 %s16, %s23
      %p93 = scmp.eq.s32.totalorder %s92, 0
      %s95 = sadd.s32 %s94, 1
      %s96 = scalar_select %p93, %s94, %s95
      %p99 = pneg %p93
      %p100 = scmp.eq.s32.totalorder %s16, 1
      %p101 = por %p99, %p100
      %p102 = scmp.ne.s32.totalorder %s94, %s97
      %p103 = scmp.eq.s32.totalorder %s16, 0
      %p104 = por %p102, %p103
      %p105 = scmp.ne.s32.totalorder %s94, %s97
      %p106 = scmp.eq.s32.totalorder %s21, 1
      %p107 = por %p105, %p106
      %p108 = scmp.ne.s32.totalorder %s97, %s98
      %p109 = scmp.eq.s32.totalorder %s21, 0
      %p110 = por %p108, %p109
      %p111 = scmp.ne.s32.totalorder %s97, %s98
      %p112 = scmp.eq.s32.totalorder %s22, 1
      %p113 = por %p111, %p112
      %p115 = scmp.ne.s32.totalorder %s98, %s114
      %p116 = scmp.eq.s32.totalorder %s22, 0
      %p117 = por %p115, %p116
      %p118 = scmp.le.s32.totalorder 1, %s16
      %p119 = scmp.lt.s32.totalorder %s16, 3
      %p120 = pnand %p118, %p119
      %p121 = pneg %p120
      // Predicated region
      $region9: #{tpu_custom_call.1} parent=5 // pred_check
        _
      $region10: #{tpu_custom_call.1} parent=5 // pred_check_branch
        %123 = sbr.rel (%p120) target = $region12
      $region11: #{tpu_custom_call.1} parent=5 // pred_region
        %s124 = ssub.s32 %s16, 1
        // Predicated region
        $region13: #{tpu_custom_call.1} parent=11 // pred_check
          %p125 = pneg %p63
        $region14: #{tpu_custom_call.1} parent=11 // pred_check_branch
          %127 = sbr.rel (%p125) target = $region16
        $region15: #{tpu_custom_call.1} parent=11 // pred_region
          %s129 = ssub.s32 768, 768
          %130 = vsyncadd [#allocation6], %s129
          %s131 = sshll.u32 [#allocation5], 4
          %s132 = int_to_ptr.vmem [resolvable:$true] %s131
          %137 = dma.hbm_to_vmem [thread:$0]  %s1, 768, %s132, [#allocation6], 192, 192, 12
        $region16: #{tpu_custom_call.1} parent=11 // pred_fallthru
          _
        // Predicated region
        $region17: #{tpu_custom_call.1} parent=11 // pred_check
          %p138 = pneg %p84
        $region18: #{tpu_custom_call.1} parent=11 // pred_check_branch
          %140 = sbr.rel (%p138) target = $region20
        $region19: #{tpu_custom_call.1} parent=11 // pred_region
          _
        $region20: #{tpu_custom_call.1} parent=11 // pred_fallthru
          _
      $region12: #{tpu_custom_call.1} parent=5 // pred_fallthru
        _
      %p141 = scmp.lt.s32.totalorder %s16, 2
      // Predicated region
      $region21: #{tpu_custom_call.1} parent=5 // pred_check
        %p142 = pneg %p141
      $region22: #{tpu_custom_call.1} parent=5 // pred_check_branch
        %144 = sbr.rel (%p142) target = $region24
      $region23: #{tpu_custom_call.1} parent=5 // pred_region
        // Predicated region
        $region25: #{tpu_custom_call.1} parent=23 // pred_check
          %p145 = pneg %p36
        $region26: #{tpu_custom_call.1} parent=23 // pred_check_branch
          %147 = sbr.rel (%p145) target = $region28
        $region27: #{tpu_custom_call.1} parent=23 // pred_region
          %s148 = sand.u32 %s26, 1
          %s149 = scalar_lea.sflag [#allocation3], %s148
          %s150 = sand.u32 %s26, 1
          %s151 = smul.addr %s150, 8
          %s152 = scalar_lea.vmem [#allocation2], %s151
          %s154 = ssub.s32 128, 128
          %155 = vsyncadd %s149, %s154
          %s156 = smul.addr %s16, 128
          %s157 = scalar_lea.hbm %s0, %s156
          %s159 = sshll.u32 %s152, 4
          %s160 = int_to_ptr.vmem [resolvable:$true] %s159
          %162 = dma.hbm_to_vmem [thread:$0]  %s157, 128, %s160, %s149
        $region28: #{tpu_custom_call.1} parent=23 // pred_fallthru
          _
      $region24: #{tpu_custom_call.1} parent=5 // pred_fallthru
        _
      %p163 = scmp.le.s32.totalorder 1, %s16
      %p164 = scmp.lt.s32.totalorder %s16, 3
      %p165 = pnand %p163, %p164
      %p166 = pneg %p165
      // Predicated region
      $region29: #{tpu_custom_call.1} parent=5 // pred_check
        _
      $region30: #{tpu_custom_call.1} parent=5 // pred_check_branch
        %168 = sbr.rel (%p165) target = $region32
      $region31: #{tpu_custom_call.1} parent=5 // pred_region
        %s169 = ssub.s32 %s16, 1
        %s170 = sand.u32 %s29, 1
        %s171 = scalar_lea.sflag [#allocation3], %s170
        %s172 = sand.u32 %s29, 1
        %s173 = smul.addr %s172, 8
        %s174 = scalar_lea.vmem [#allocation2], %s173
        // Predicated region
        $region33: #{tpu_custom_call.1} parent=31 // pred_check
          %p175 = pneg %p42
        $region34: #{tpu_custom_call.1} parent=31 // pred_check_branch
          %177 = sbr.rel (%p175) target = $region36
        $region35: #{tpu_custom_call.1} parent=31 // pred_region
          %178 = dma.done %s171, 128
        $region36: #{tpu_custom_call.1} parent=31 // pred_fallthru
          _
        // Predicated region
        $region37: #{tpu_custom_call.1} parent=31 // pred_check
          %p179 = pneg %p63
        $region38: #{tpu_custom_call.1} parent=31 // pred_check_branch
          %181 = sbr.rel (%p179) target = $region40
        $region39: #{tpu_custom_call.1} parent=31 // pred_region
          %182 = dma.done [#allocation6], 768
        $region40: #{tpu_custom_call.1} parent=31 // pred_fallthru
          _
        %s183 = sand.u32 %s29, 1
        %s184 = scalar_lea.sflag [#allocation3], %s183
        %s185 = sand.u32 %s29, 1
        %s186 = smul.addr %s185, 8
        %s187 = scalar_lea.vmem [#allocation2], %s186
        %p188 = pneg %p42
        %p189 = pneg %p39
        %p190 = pneg %p63
        %p191 = pneg %p60
        %p192 = pneg %p84
        %p193 = pneg %p81
        %p194 = pneg %p110
        %p195 = pneg %p107
        %s196 = sand.u32 %s97, 1
        %s197 = scalar_lea.sflag [#allocation4], %s196
        %s198 = sand.u32 %s97, 1
        %s199 = smul.addr %s198, 8
        %s200 = scalar_lea.vmem [#allocation7], %s199
        %v202 = vld [vmem:[%s174] sm:$0xff]
        %v203 = vpack.c.bf16 %v202, %v202
        %v204 = vld [vmem:[#allocation5] sm:$0xff]
        %v205 = vld [vmem:[#allocation5 + $0x8] sm:$0xf]
        %v206 = vld [vmem:[#allocation5 + $0xc] sm:$0xff]
        %v207 = vld [vmem:[#allocation5 + $0x14] sm:$0xf]
        %v208 = vld [vmem:[#allocation5 + $0x18] sm:$0xff]
        %v209 = vld [vmem:[#allocation5 + $0x20] sm:$0xf]
        %v210 = vld [vmem:[#allocation5 + $0x24] sm:$0xff]
        %v211 = vld [vmem:[#allocation5 + $0x2c] sm:$0xf]
        %v212 = vld [vmem:[%s2] sm:$0x7]
        %v214 = vlaneseq
        %v215 = vshrl.u32 %v214, 7
        %v216 = vsub.s32 0, %v215
        %v217 = vrot.slane %v212, %v216
        %v218 = vlaneseq
        %v219 = vshrl.u32 %v218, 7
        %v220 = vsub.s32 1, %v219
        %v221 = vrot.slane %v212, %v220
        %v222 = vlaneseq
        %v223 = vshrl.u32 %v222, 7
        %v224 = vsub.s32 2, %v223
        %v225 = vrot.slane %v212, %v224
        %v237 = vunpack.c.l.b16 %v204
        %v238 = vunpack.c.h.b16 %v204
        %v239 = vunpack.c.l.b16 %v205
        %v240 = vunpack.c.l.b16 %v206
        %v241 = vunpack.c.h.b16 %v206
        %v242 = vunpack.c.l.b16 %v207
        %v243 = vunpack.c.l.b16 %v208
        %v244 = vunpack.c.h.b16 %v208
        %v245 = vunpack.c.l.b16 %v209
        %v246 = vunpack.c.l.b16 %v210
        %v247 = vunpack.c.h.b16 %v210
        %v248 = vunpack.c.l.b16 %v211
        %v249 = vpack.c.b16 %v240, %v237
        %v250 = vpack.c.b16 %v241, %v238
        %v251 = vpack.c.b16 %v242, %v239
        %v252 = vpack.c.b16 %v246, %v243
        %v253 = vpack.c.b16 %v247, %v244
        %v254 = vpack.c.b16 %v248, %v245
        %vm261 = vcmask 261120
        %v263 = vsel %vm261, %v203, 0
        %265 = vmatprep.subr.bf16.mxu0 %v250
        %266 = vmatpush1.bf16.msra.mxu0 %v249
        %267 = vmatprep.subr.bf16.mxu0 %v253
        %268 = vmatpush1.bf16.msra.mxu0 %v252
        %269 = vmatprep.subr.bf16.mxu0 0
        %270 = vmatpush1.bf16.msra.mxu0 0
        %271 = vmatprep.subr.bf16.mxu0 0
        %272 = vmatpush1.bf16.msra.mxu0 0
        %273 = vmatprep.subr.bf16.mxu0 0
        %274 = vmatpush1.bf16.msra.mxu0 0
        %275 = vmatprep.subr.bf16.mxu0 0
        %276 = vmatpush1.bf16.msra.mxu0 0
        %277 = vmatprep.subr.bf16.mxu0 0
        %278 = vmatpush1.bf16.msra.mxu0 0
        %279 = vmatprep.subr.bf16.mxu0 0
        %280 = vmatpush1.bf16.msra.mxu0 0
        %281 = vmatprep.subr.bf16.mxu0 0
        %282 = vmatpush1.bf16.msra.mxu0 0
        %283 = vmatprep.subr.bf16.mxu0 0
        %284 = vmatpush1.bf16.msra.mxu0 0
        %285 = vmatprep.subr.bf16.mxu0 0
        %286 = vmatpush1.bf16.msra.mxu0 0
        %287 = vmatprep.subr.bf16.mxu0 0
        %288 = vmatpush1.bf16.msra.mxu0 0
        %289 = vmatprep.subr.bf16.mxu0 0
        %290 = vmatpush1.bf16.msra.mxu0 0
        %291 = vmatprep.subr.bf16.mxu0 0
        %292 = vmatpush1.bf16.msra.mxu0 0
        %293 = vmatprep.subr.bf16.mxu0 0
        %294 = vmatpush1.bf16.msra.mxu0 0
        %295 = vmatprep.subr.bf16.mxu0 0
        %296 = vmatpush1.bf16.msra.mxu0 0
        %297 = vmatprep.mubr.bf16.mxu0 0
        %298 = vmatmul.mubr.bf16.gmra.mrb[0].mxu0 %v263
        %v299 = vpop.f32.mrb[0].mxu0
        %v300 = vadd.f32 %v217, %v299
        %v301 = vpop.f32.mrb[0].mxu0
        %v302 = vadd.f32 %v221, %v301
        %v303 = vpop.f32.mrb[0].mxu0
        %v304 = vpop.f32.mrb[0].mxu0
        %305 = vdwg.mxu0
        %306 = vmatprep.subr.bf16.mxu0 0
        %307 = vmatpush1.bf16.msra.mxu0 %v251
        %308 = vmatprep.subr.bf16.mxu0 0
        %309 = vmatpush1.bf16.msra.mxu0 %v254
        %310 = vmatprep.subr.bf16.mxu0 0
        %311 = vmatpush1.bf16.msra.mxu0 0
        %312 = vmatprep.subr.bf16.mxu0 0
        %313 = vmatpush1.bf16.msra.mxu0 0
        %314 = vmatprep.subr.bf16.mxu0 0
        %315 = vmatpush1.bf16.msra.mxu0 0
        %316 = vmatprep.subr.bf16.mxu0 0
        %317 = vmatpush1.bf16.msra.mxu0 0
        %318 = vmatprep.subr.bf16.mxu0 0
        %319 = vmatpush1.bf16.msra.mxu0 0
        %320 = vmatprep.subr.bf16.mxu0 0
        %321 = vmatpush1.bf16.msra.mxu0 0
        %322 = vmatprep.subr.bf16.mxu0 0
        %323 = vmatpush1.bf16.msra.mxu0 0
        %324 = vmatprep.subr.bf16.mxu0 0
        %325 = vmatpush1.bf16.msra.mxu0 0
        %326 = vmatprep.subr.bf16.mxu0 0
        %327 = vmatpush1.bf16.msra.mxu0 0
        %328 = vmatprep.subr.bf16.mxu0 0
        %329 = vmatpush1.bf16.msra.mxu0 0
        %330 = vmatprep.subr.bf16.mxu0 0
        %331 = vmatpush1.bf16.msra.mxu0 0
        %332 = vmatprep.subr.bf16.mxu0 0
        %333 = vmatpush1.bf16.msra.mxu0 0
        %334 = vmatprep.subr.bf16.mxu0 0
        %335 = vmatpush1.bf16.msra.mxu0 0
        %336 = vmatprep.subr.bf16.mxu0 0
        %337 = vmatpush1.bf16.msra.mxu0 0
        %338 = vmatprep.mubr.bf16.mxu0 0
        %339 = vmatmul.mubr.bf16.gmra.mrb[0].mxu0 %v263
        %v340 = vpop.f32.mrb[0].mxu0
        %v341 = vadd.f32 %v225, %v340
        %v342 = vpop.f32.mrb[0].mxu0
        %v343 = vpop.f32.mrb[0].mxu0
        %v344 = vpop.f32.mrb[0].mxu0
        %345 = vdwg.mxu0
        %v346 = vpack.c.bf16 %v300, %v300
        %v347 = vpack.c.bf16 %v302, %v302
        %348 = vmatprep.subr.bf16.mxu0 0
        %349 = vmatpush1.bf16.xpose.msra.mxu0 %v347
        %350 = vmatprep.subr.bf16.mxu0 0
        %351 = vmatpush1.bf16.xpose.msra.mxu0 0
        %352 = vmatprep.subr.bf16.mxu0 0
        %353 = vmatpush1.bf16.xpose.msra.mxu0 0
        %354 = vmatprep.subr.bf16.mxu0 0
        %355 = vmatpush1.bf16.xpose.msra.mxu0 0
        %356 = vmatprep.subr.bf16.mxu0 0
        %357 = vmatpush1.bf16.xpose.msra.mxu0 0
        %358 = vmatprep.subr.bf16.mxu0 0
        %359 = vmatpush1.bf16.xpose.msra.mxu0 0
        %360 = vmatprep.subr.bf16.mxu0 0
        %361 = vmatpush1.bf16.xpose.msra.mxu0 0
        %362 = vmatprep.subr.bf16.mxu0 0
        %363 = vmatpush1.bf16.xpose.msra.mxu0 0
        %364 = vmatprep.subr.bf16.mxu0 0
        %365 = vmatpush1.bf16.xpose.msra.mxu0 0
        %366 = vmatprep.subr.bf16.mxu0 0
        %367 = vmatpush1.bf16.xpose.msra.mxu0 0
        %368 = vmatprep.subr.bf16.mxu0 0
        %369 = vmatpush1.bf16.xpose.msra.mxu0 0
        %370 = vmatprep.subr.bf16.mxu0 0
        %371 = vmatpush1.bf16.xpose.msra.mxu0 0
        %372 = vmatprep.subr.bf16.mxu0 0
        %373 = vmatpush1.bf16.xpose.msra.mxu0 0
        %374 = vmatprep.subr.bf16.mxu0 0
        %375 = vmatpush1.bf16.xpose.msra.mxu0 0
        %376 = vmatprep.subr.bf16.mxu0 0
        %377 = vmatpush1.bf16.xpose.msra.mxu0 0
        %378 = vmatprep.subr.bf16.mxu0 0
        %379 = vmatpush1.bf16.xpose.msra.mxu0 0
        %380 = vmatprep.mubr.bf16.mxu0 0
        %381 = vmatmul.mubr.bf16.gmra.mrb[0].mxu0 %v346
        %v382 = vpop.f32.mrb[0].mxu0
        %v383 = vadd.f32 0.0, %v382
        %v384 = vpop.f32.mrb[0].mxu0
        %v385 = vpop.f32.mrb[0].mxu0
        %v386 = vpop.f32.mrb[0].mxu0
        %387 = vdwg.mxu0
        %vm388 = vcmask 64512
        %v389 = vsel %vm388, %v383, -inf
        %390 = vmax.xlane.f32.xlu0 %v389
        %v391 = vpop.xlane.xlu0 %390
        %v392 = vsub.f32 %v383, %v391
        %v393 = vmul.f32 %v392, 1.442695
        %v394 = vpow.pop %v393
        %v395 = vsel %vm388, %v394, 0.0
        %396 = vadd.xlane.f32.xlu0 %v395
        %v397 = vpop.xlane.xlu0 %396
        %v398 = vpack.c.bf16 %v394, %v394
        %v399 = vpack.c.bf16 %v341, %v341
        %v401 = vsel %vm388, %v398, 0
        %vm403 = vcmask 1043456
        %v405 = vsel %vm403, %v399, 0
        %407 = vmatprep.subr.bf16.mxu0 0
        %408 = vmatpush1.bf16.msra.mxu0 %v405
        %409 = vmatprep.subr.bf16.mxu0 0
        %410 = vmatpush1.bf16.msra.mxu0 0
        %411 = vmatprep.subr.bf16.mxu0 0
        %412 = vmatpush1.bf16.msra.mxu0 0
        %413 = vmatprep.subr.bf16.mxu0 0
        %414 = vmatpush1.bf16.msra.mxu0 0
        %415 = vmatprep.subr.bf16.mxu0 0
        %416 = vmatpush1.bf16.msra.mxu0 0
        %417 = vmatprep.subr.bf16.mxu0 0
        %418 = vmatpush1.bf16.msra.mxu0 0
        %419 = vmatprep.subr.bf16.mxu0 0
        %420 = vmatpush1.bf16.msra.mxu0 0
        %421 = vmatprep.subr.bf16.mxu0 0
        %422 = vmatpush1.bf16.msra.mxu0 0
        %423 = vmatprep.subr.bf16.mxu0 0
        %424 = vmatpush1.bf16.msra.mxu0 0
        %425 = vmatprep.subr.bf16.mxu0 0
        %426 = vmatpush1.bf16.msra.mxu0 0
        %427 = vmatprep.subr.bf16.mxu0 0
        %428 = vmatpush1.bf16.msra.mxu0 0
        %429 = vmatprep.subr.bf16.mxu0 0
        %430 = vmatpush1.bf16.msra.mxu0 0
        %431 = vmatprep.subr.bf16.mxu0 0
        %432 = vmatpush1.bf16.msra.mxu0 0
        %433 = vmatprep.subr.bf16.mxu0 0
        %434 = vmatpush1.bf16.msra.mxu0 0
        %435 = vmatprep.subr.bf16.mxu0 0
        %436 = vmatpush1.bf16.msra.mxu0 0
        %437 = vmatprep.subr.bf16.mxu0 0
        %438 = vmatpush1.bf16.msra.mxu0 0
        %439 = vmatprep.mubr.bf16.mxu0 0
        %440 = vmatmul.mubr.bf16.gmra.mrb[0].mxu0 %v401
        %v441 = vpop.f32.mrb[0].mxu0
        %v442 = vadd.f32 0.0, %v441
        %v443 = vpop.f32.mrb[0].mxu0
        %v444 = vpop.f32.mrb[0].mxu0
        %v445 = vpop.f32.mrb[0].mxu0
        %446 = vdwg.mxu0
        %v447 = vrcp.pop %v397
        %v448 = vmul.f32 %v442, %v447
        %449 = vst [vmem:[%s200] sm:$0xff] %v448
        %s450 = sand.u32 %s97, 1
        %s451 = scalar_lea.sflag [#allocation4], %s450
        %s452 = sand.u32 %s97, 1
        %s453 = smul.addr %s452, 8
        %s454 = scalar_lea.vmem [#allocation7], %s453
        // Predicated region
        $region41: #{tpu_custom_call.1} parent=31 // pred_check
          %p455 = pneg %p107
        $region42: #{tpu_custom_call.1} parent=31 // pred_check_branch
          %457 = sbr.rel (%p455) target = $region44
        $region43: #{tpu_custom_call.1} parent=31 // pred_region
          %s459 = ssub.s32 128, 128
          %460 = vsyncadd %s451, %s459
          %s461 = smul.addr %s21, 128
          %s462 = scalar_lea.hbm %s3, %s461
          %s464 = sshll.u32 %s454, 4
          %s465 = int_to_ptr.vmem [resolvable:$true] %s464
          %467 = dma.vmem_to_hbm [thread:$0]  %s465, 128, %s462, %s451
        $region44: #{tpu_custom_call.1} parent=31 // pred_fallthru
          _
      $region32: #{tpu_custom_call.1} parent=5 // pred_fallthru
        _
      %p468 = scmp.le.s32.totalorder 2, %s16
      // Predicated region
      $region45: #{tpu_custom_call.1} parent=5 // pred_check
        %p469 = pneg %p468
      $region46: #{tpu_custom_call.1} parent=5 // pred_check_branch
        %471 = sbr.rel (%p469) target = $region48
      $region47: #{tpu_custom_call.1} parent=5 // pred_region
        %s472 = ssub.s32 %s16, 2
        // Predicated region
        $region49: #{tpu_custom_call.1} parent=47 // pred_check
          %p473 = pneg %p113
        $region50: #{tpu_custom_call.1} parent=47 // pred_check_branch
          %475 = sbr.rel (%p473) target = $region52
        $region51: #{tpu_custom_call.1} parent=47 // pred_region
          %s476 = sand.u32 %s98, 1
          %s477 = scalar_lea.sflag [#allocation4], %s476
          %s478 = sand.u32 %s98, 1
          %s479 = smul.addr %s478, 8
          %s480 = scalar_lea.vmem [#allocation7], %s479
          %481 = dma.done %s477, 128
        $region52: #{tpu_custom_call.1} parent=47 // pred_fallthru
          _
      $region48: #{tpu_custom_call.1} parent=5 // pred_fallthru
        _
    $region6: #{tpu_custom_call.1} parent=1 // loop_footer
      %s20 = sadd.s32 1, %s16
    $region7: #{tpu_custom_call.1} parent=1 // loop_footer_branch
      %15 = sbr.rel target = $region3
    $region8: #{tpu_custom_call.1} parent=1 // loop_exit
      _
    %482 = vsyncpa [#allocation3], 1
    %s483 = scalar_lea.sflag [#allocation3], 1
    %484 = vsyncpa %s483, 1
    %485 = vsyncpa [#allocation6], 1
    %486 = vsyncpa [#allocation4], 1
    %s487 = scalar_lea.sflag [#allocation4], 1
    %488 = vsyncpa %s487, 1

</llo_original>
